<compile_context>
chip_gen: v7x
topology: tpu7x:2x2x1
jax: 0.10.0
libtpu: 0.0.40
codegen_flags: <defaults>
</compile_context>

<pallas_src>
import functools

import jax
import jax.numpy as jnp
from jax import lax
from jax.experimental import pallas as pl
from jax.experimental.pallas import tpu as pltpu


def _round_up(x, m):
    return ((x + m - 1) // m) * m


def _reinforce_kernel(actions_ref, logprobs_ref, reward_ref, out_ref, *,
                      batch, block_b, steps):
    p = pl.program_id(0)          # "parallel" axis (megacore split on v7x)
    k = pl.program_id(1)          # "arbitrary" reduction axis
    blk = p * steps + k           # logical (unclamped) row-block index
    row_start = blk * block_b

    shape = logprobs_ref.shape    # (block_b, C)
    rows = lax.broadcasted_iota(jnp.int32, shape, 0) + row_start
    # Rows past B (tail padding of the last block, or clamped duplicate
    # blocks when the grid over-covers) contribute exactly zero.
    valid = rows < batch

    prod = (actions_ref[...].astype(jnp.float32)
            * logprobs_ref[...].astype(jnp.float32)
            * reward_ref[...].astype(jnp.float32))
    sel = jnp.where(valid, prod, 0.0)

    # Collapse (block_b, C) -> (8, C) with pure VALU adds (no XLU reduce and
    # no serialized scalar read-modify-write in the hot loop).
    partial = sel.reshape(block_b // 8, 8, shape[1]).sum(axis=0)

    @pl.when(k == 0)
    def _():
        out_ref[...] = partial

    @pl.when(k != 0)
    def _():
        out_ref[...] += partial


def reinforce_criterion(actions, logprobs, reward, *, block_b=None):
    """actions / logprobs / reward: (B, C).  Returns a scalar f32 equal to
    sum(-1.0 * actions * logprobs * reward) / B (the PyTorch forward)."""
    B, C = logprobs.shape
    assert actions.shape == (B, C) and reward.shape == (B, C)

    # --- tile sizing: ~2 MiB per f32 input stream per pipeline buffer ------
    lane_c = _round_up(C, 128)            # lanes actually occupied in VMEM
    if block_b is None:
        target_tile_bytes = 2 * 1024 * 1024
        block_b = max(8, (target_tile_bytes // (lane_c * 4)) // 8 * 8)
    num_parallel = 2                      # v7x has 2 TensorCores per chip
    # Never allocate a tile bigger than the (8-rounded) per-core batch slice.
    block_b = min(block_b, max(8, _round_up(pl.cdiv(B, num_parallel), 8)))
    block_b = max(8, _round_up(block_b, 8))

    total_blocks = pl.cdiv(B, block_b)
    num_parallel = min(num_parallel, total_blocks)
    steps = pl.cdiv(total_blocks, num_parallel)

    # Explicit VMEM budget: 3 streams x 2 pipeline buffers + the small
    # resident output.  Stays well under v7x's 64 MiB physical VMEM (and
    # under v5e/v6e scoped limits once raised).
    data_tile = block_b * lane_c * 4
    footprint = 3 * 2 * data_tile + 2 * 8 * lane_c * 4
    vmem_limit = int(min(max(2 * footprint, 16 * 1024 * 1024),
                         56 * 1024 * 1024))

    def blk_map(p, k):
        # Clamp so duplicate / tail blocks never DMA out of bounds; their
        # rows are masked out inside the kernel.
        return (jnp.minimum(p * steps + k, total_blocks - 1), 0)

    kernel = functools.partial(_reinforce_kernel, batch=B, block_b=block_b,
                               steps=steps)

    partials = pl.pallas_call(
        kernel,
        out_shape=jax.ShapeDtypeStruct((num_parallel * 8, C), jnp.float32),
        grid_spec=pltpu.PrefetchScalarGridSpec(
            num_scalar_prefetch=0,
            grid=(num_parallel, steps),
            in_specs=[
                pl.BlockSpec((block_b, C), blk_map),
                pl.BlockSpec((block_b, C), blk_map),
                pl.BlockSpec((block_b, C), blk_map),
            ],
            out_specs=pl.BlockSpec((8, C), lambda p, k: (p, 0)),
        ),
        compiler_params=pltpu.CompilerParams(
            dimension_semantics=("parallel", "arbitrary"),
            vmem_limit_bytes=vmem_limit),
    )(actions, logprobs, reward)

    # Fold the -1.0 and the 1/B into a single scale applied once to the tiny
    # (num_parallel*8, C) partial tile.
    return jnp.sum(partials) * (-1.0 / B)


if __name__ == "__main__":
    key = jax.random.PRNGKey(0)

    def run_case(case_key, B, C):
        k_act, k_logit, k_rew = jax.random.split(case_key, 3)
        action_ids = jax.random.randint(k_act, (B,), 0, C)
        actions = jax.nn.one_hot(action_ids, C, dtype=jnp.int32)
        logits = jax.random.normal(k_logit, (B, C), dtype=jnp.float32)
        logprobs = jax.nn.log_softmax(logits, axis=-1)
        reward = jax.random.normal(k_rew, (B, C), dtype=jnp.float32)

        out = jax.block_until_ready(
            reinforce_criterion(actions, logprobs, reward))
        ref = jnp.sum(-1.0 * actions.astype(jnp.float32) * logprobs * reward) / B
        assert jnp.allclose(out, ref, rtol=1e-5, atol=1e-5), (B, C, out, ref)

    k1, k2 = jax.random.split(key)
    run_case(k1, 8, 128)    # small canonical B x C case
    run_case(k2, 50, 128)   # exercises tail-row masking + 2-way parallel split
    print("KERNEL_OK")
</pallas_src>

<mosaic_0001>
module attributes {stable_mosaic.version = 11 : i64} {
  func.func @_reinforce_kernel(%arg0: i32, %arg1: i32, %arg2: memref<8x128xi32, #tpu.memory_space<vmem>>, %arg3: memref<8x128xf32, #tpu.memory_space<vmem>>, %arg4: memref<8x128xf32, #tpu.memory_space<vmem>>, %arg5: memref<8x128xf32, #tpu.memory_space<vmem>>) attributes {dimension_semantics = [#tpu.dimension_semantics<parallel>, #tpu.dimension_semantics<arbitrary>], iteration_bounds = array<i64: 1, 1>, scalar_prefetch = 0 : i64, scratch_operands = 0 : i64, tpu.core_type = #tpu.core_type<tc>, window_params = [{transform_indices = @transform_0, window_bounds = array<i64: 8, 128>}, {transform_indices = @transform_1, window_bounds = array<i64: 8, 128>}, {transform_indices = @transform_2, window_bounds = array<i64: 8, 128>}, {transform_indices = @transform_3, window_bounds = array<i64: 8, 128>}]} {
    %c1_i32 = arith.constant 1 : i32
    %0 = arith.muli %arg0, %c1_i32 : i32
    %1 = arith.addi %0, %arg1 : i32
    %c8_i32 = arith.constant 8 : i32
    %2 = arith.muli %1, %c8_i32 : i32
    %3 = tpu.iota {dimensions = array<i32: 0>} : vector<8x128xi32>
    %4 = vector.broadcast %2 : i32 to vector<8x128xi32>
    %5 = arith.addi %3, %4 : vector<8x128xi32>
    %c8_i32_0 = arith.constant 8 : i32
    %6 = vector.broadcast %c8_i32_0 : i32 to vector<8x128xi32>
    %7 = arith.cmpi slt, %5, %6 : vector<8x128xi32>
    %c0 = arith.constant 0 : index
    %c0_1 = arith.constant 0 : index
    %8 = vector.load %arg2[%c0, %c0_1] : memref<8x128xi32, #tpu.memory_space<vmem>>, vector<8x128xi32>
    %9 = arith.sitofp %8 : vector<8x128xi32> to vector<8x128xf32>
    %c0_2 = arith.constant 0 : index
    %c0_3 = arith.constant 0 : index
    %10 = vector.load %arg3[%c0_2, %c0_3] : memref<8x128xf32, #tpu.memory_space<vmem>>, vector<8x128xf32>
    %11 = arith.mulf %9, %10 : vector<8x128xf32>
    %c0_4 = arith.constant 0 : index
    %c0_5 = arith.constant 0 : index
    %12 = vector.load %arg4[%c0_4, %c0_5] : memref<8x128xf32, #tpu.memory_space<vmem>>, vector<8x128xf32>
    %13 = arith.mulf %11, %12 : vector<8x128xf32>
    %cst = arith.constant 0.000000e+00 : f32
    %14 = vector.broadcast %cst : f32 to vector<8x128xf32>
    %15 = arith.select %7, %13, %14 : vector<8x128xi1>, vector<8x128xf32>
    %16 = vector.shape_cast %15 : vector<8x128xf32> to vector<1x8x128xf32>
    %cst_6 = arith.constant dense<0.000000e+00> : vector<8x128xf32>
    %17 = vector.multi_reduction <add>, %16, %cst_6 [0] : vector<1x8x128xf32> to vector<8x128xf32>
    %c0_i32 = arith.constant 0 : i32
    %18 = arith.cmpi eq, %arg1, %c0_i32 : i32
    %19 = arith.extui %18 : i1 to i32
    %c0_i32_7 = arith.constant 0 : i32
    %20 = arith.cmpi ne, %19, %c0_i32_7 : i32
    scf.if %20 {
      %c0_10 = arith.constant 0 : index
      %c0_11 = arith.constant 0 : index
      %24 = vector.load %arg5[%c0_10, %c0_11] : memref<8x128xf32, #tpu.memory_space<vmem>>, vector<8x128xf32>
      tpu.vector_store %arg5[%c0_10, %c0_11], %17 {strides = array<i32>} : memref<8x128xf32, #tpu.memory_space<vmem>>, vector<8x128xf32>,
    } else {
    }
    %c0_i32_8 = arith.constant 0 : i32
    %21 = arith.cmpi ne, %arg1, %c0_i32_8 : i32
    %22 = arith.extui %21 : i1 to i32
    %c0_i32_9 = arith.constant 0 : i32
    %23 = arith.cmpi ne, %22, %c0_i32_9 : i32
    scf.if %23 {
      %c0_10 = arith.constant 0 : index
      %c0_11 = arith.constant 0 : index
      %24 = vector.load %arg5[%c0_10, %c0_11] : memref<8x128xf32, #tpu.memory_space<vmem>>, vector<8x128xf32>
      %25 = arith.addf %24, %17 : vector<8x128xf32>
      %c0_12 = arith.constant 0 : index
      %c0_13 = arith.constant 0 : index
      %26 = vector.load %arg5[%c0_12, %c0_13] : memref<8x128xf32, #tpu.memory_space<vmem>>, vector<8x128xf32>
      tpu.vector_store %arg5[%c0_12, %c0_13], %25 {strides = array<i32>} : memref<8x128xf32, #tpu.memory_space<vmem>>, vector<8x128xf32>,
    } else {
    }
    return
  }
  func.func @transform_0(%arg0: i32, %arg1: i32) -> (i32, i32) {
    %c1_i32 = arith.constant 1 : i32
    %0 = arith.muli %arg0, %c1_i32 : i32
    %1 = arith.addi %0, %arg1 : i32
    %c0_i32 = arith.constant 0 : i32
    %2 = arith.minsi %1, %c0_i32 : i32
    %c0_i32_0 = arith.constant 0 : i32
    %c0_i32_1 = arith.constant 0 : i32
    return %2, %c0_i32_0 : i32, i32
  }
  func.func @transform_1(%arg0: i32, %arg1: i32) -> (i32, i32) {
    %c1_i32 = arith.constant 1 : i32
    %0 = arith.muli %arg0, %c1_i32 : i32
    %1 = arith.addi %0, %arg1 : i32
    %c0_i32 = arith.constant 0 : i32
    %2 = arith.minsi %1, %c0_i32 : i32
    %c0_i32_0 = arith.constant 0 : i32
    %c0_i32_1 = arith.constant 0 : i32
    return %2, %c0_i32_0 : i32, i32
  }
  func.func @transform_2(%arg0: i32, %arg1: i32) -> (i32, i32) {
    %c1_i32 = arith.constant 1 : i32
    %0 = arith.muli %arg0, %c1_i32 : i32
    %1 = arith.addi %0, %arg1 : i32
    %c0_i32 = arith.constant 0 : i32
    %2 = arith.minsi %1, %c0_i32 : i32
    %c0_i32_0 = arith.constant 0 : i32
    %c0_i32_1 = arith.constant 0 : i32
    return %2, %c0_i32_0 : i32, i32
  }
  func.func @transform_3(%arg0: i32, %arg1: i32) -> (i32, i32) {
    %c0_i32 = arith.constant 0 : i32
    %c0_i32_0 = arith.constant 0 : i32
    return %arg0, %c0_i32 : i32, i32
  }
}

</mosaic_0001>

<llo_original>
// kernel: tpu_custom_call.1
$region0: #{tpu_custom_call.1}
  #allocation0 [shape = 'u32[]', space=smem, size = 0x4, offset = 0x4, fixed_abs, tag = 'smem constant byte address 0x4 - core index']
  #allocation1 [shape = 'u32[144,128]{1,0:T(1,128)}', space=vmem, size = 0x12000, scoped, tag = 'internal scratch']
  %s0 = inlined_call_operand.hbm [shape: s32[8,128], index: 0, kind: input, shape index: {}]
  %s1 = inlined_call_operand.hbm [shape: f32[8,128], index: 1, kind: input, shape index: {}]
  %s2 = inlined_call_operand.hbm [shape: f32[8,128], index: 2, kind: input, shape index: {}]
  %s3 = inlined_call_operand.hbm [shape: f32[8,128], index: 3, kind: output, shape index: {}]
  %s4 = sld [smem:[#allocation0]]
  $region42: #{tpu_custom_call.1} parent=0
    _
  %s6 = ssub.s32 1, %s4
  %s7 = scalar_select 0, %s6, %s4
  $region1: #{tpu_custom_call.1} parent=0
    #allocation2 [shape = 'u8[4096]{0}', space=vmem, size = 0x1000, scoped, tag = 'input window, operand 0, single buffered']
    #allocation3 [shape = 's32[1]{0}', space=sflag, size = 0x4, scoped, tag = 'scoped memory for tpu_custom_call.1']
    #allocation4 [shape = 's32[1]{0}', space=sflag, size = 0x4, scoped, tag = 'scoped memory for tpu_custom_call.1']
    #allocation5 [shape = 'u8[4096]{0}', space=vmem, size = 0x1000, scoped, tag = 'input window, operand 1, single buffered']
    #allocation6 [shape = 's32[1]{0}', space=sflag, size = 0x4, scoped, tag = 'scoped memory for tpu_custom_call.1']
    #allocation7 [shape = 'u8[4096]{0}', space=vmem, size = 0x1000, scoped, tag = 'input window, operand 2, single buffered']
    #allocation8 [shape = 'u8[4096]{0}', space=vmem, size = 0x1000, scoped, tag = 'output window, operand 0, single buffered']
    %8 = vsyncpa [#allocation3], 0
    %9 = vsyncpa [#allocation6], 0
    %10 = vsyncpa [#allocation4], 0
    // Predicated region
    $region2: #{tpu_custom_call.1} parent=1 // pred_check
      _
    $region3: #{tpu_custom_call.1} parent=1 // pred_check_branch
      %12 = sbr.rel (0) target = $region5
    $region4: #{tpu_custom_call.1} parent=1 // pred_region
      %s13 = sadd.s32 0, 0
      %p14 = scmp.lt.s32.totalorder %s13, 0
      %s15 = scalar_select %p14, %s13, 0
      %s17 = ssub.s32 128, 128
      %18 = vsyncadd [#allocation3], %s17
      %s19 = smul.addr %s15, 128
      %s20 = scalar_lea.hbm %s0, %s19
      %s22 = sshll.u32 [#allocation2], 4
      %s23 = int_to_ptr.vmem [resolvable:$true] %s22
      %25 = dma.hbm_to_vmem [thread:$0]  %s20, 128, %s23, [#allocation3]
    $region5: #{tpu_custom_call.1} parent=1 // pred_fallthru
      _
    // Predicated region
    $region6: #{tpu_custom_call.1} parent=1 // pred_check
      _
    $region7: #{tpu_custom_call.1} parent=1 // pred_check_branch
      %27 = sbr.rel (0) target = $region9
    $region8: #{tpu_custom_call.1} parent=1 // pred_region
      %s28 = sadd.s32 0, 0
      %p29 = scmp.lt.s32.totalorder %s28, 0
      %s30 = scalar_select %p29, %s28, 0
      %s32 = ssub.s32 128, 128
      %33 = vsyncadd [#allocation6], %s32
      %s34 = smul.addr %s30, 128
      %s35 = scalar_lea.hbm %s1, %s34
      %s37 = sshll.u32 [#allocation5], 4
      %s38 = int_to_ptr.vmem [resolvable:$true] %s37
      %40 = dma.hbm_to_vmem [thread:$0]  %s35, 128, %s38, [#allocation6]
    $region9: #{tpu_custom_call.1} parent=1 // pred_fallthru
      _
    // Predicated region
    $region10: #{tpu_custom_call.1} parent=1 // pred_check
      _
    $region11: #{tpu_custom_call.1} parent=1 // pred_check_branch
      %42 = sbr.rel (0) target = $region13
    $region12: #{tpu_custom_call.1} parent=1 // pred_region
      %s43 = sadd.s32 0, 0
      %p44 = scmp.lt.s32.totalorder %s43, 0
      %s45 = scalar_select %p44, %s43, 0
      %s47 = ssub.s32 128, 128
      %48 = vsyncadd [#allocation6], %s47
      %s49 = smul.addr %s45, 128
      %s50 = scalar_lea.hbm %s2, %s49
      %s52 = sshll.u32 [#allocation7], 4
      %s53 = int_to_ptr.vmem [resolvable:$true] %s52
      %55 = dma.hbm_to_vmem [thread:$0]  %s50, 128, %s53, [#allocation6]
    $region13: #{tpu_custom_call.1} parent=1 // pred_fallthru
      _
    // Predicated region
    $region14: #{tpu_custom_call.1} parent=1 // pred_check
      _
    $region15: #{tpu_custom_call.1} parent=1 // pred_check_branch
      %57 = sbr.rel (0) target = $region17
    $region16: #{tpu_custom_call.1} parent=1 // pred_region
      %58 = dma.done [#allocation3], 128
    $region17: #{tpu_custom_call.1} parent=1 // pred_fallthru
      _
    // Predicated region
    $region18: #{tpu_custom_call.1} parent=1 // pred_check
      _
    $region19: #{tpu_custom_call.1} parent=1 // pred_check_branch
      %60 = sbr.rel (0) target = $region21
    $region20: #{tpu_custom_call.1} parent=1 // pred_region
      %61 = dma.done [#allocation6], 128
    $region21: #{tpu_custom_call.1} parent=1 // pred_fallthru
      _
    // Predicated region
    $region22: #{tpu_custom_call.1} parent=1 // pred_check
      _
    $region23: #{tpu_custom_call.1} parent=1 // pred_check_branch
      %63 = sbr.rel (0) target = $region25
    $region24: #{tpu_custom_call.1} parent=1 // pred_region
      %64 = dma.done [#allocation6], 128
    $region25: #{tpu_custom_call.1} parent=1 // pred_fallthru
      _
    %s65 = sadd.s32 0, 0
    %p66 = scmp.lt.s32.totalorder %s65, 0
    %s67 = scalar_select %p66, %s65, 0
    %s68 = sadd.s32 0, 0
    %p69 = scmp.lt.s32.totalorder %s68, 0
    %s70 = scalar_select %p69, %s68, 0
    %s71 = sadd.s32 0, 0
    %p72 = scmp.lt.s32.totalorder %s71, 0
    %s73 = scalar_select %p72, %s71, 0
    %s74 = sadd.s32 0, 0
    %s75 = smul.u32 %s74, 8
    %v76 = vlaneseq
    %v77 = vshrl.u32 %v76, 7
    %v78 = vstv %s75
    %v79 = vadd.s32 %v77, %v78
    %vm80 = vcmp.lt.s32.totalorder %v79, 8
    %v81 = vld [vmem:[#allocation2] sm:$0xff]
    %v82 = vcvt.s32.f32 %v81
    %v83 = vld [vmem:[#allocation5] sm:$0xff]
    %v84 = vmul.f32 %v82, %v83
    %v85 = vld [vmem:[#allocation7] sm:$0xff]
    %v86 = vmul.f32 %v84, %v85
    %v87 = vsel %vm80, %v86, 0.0
    %v88 = vadd.f32 %v87, 0.0
    %p89 = scmp.eq.s32.totalorder 0, 0
    // Predicated region
    $region26: #{tpu_custom_call.1} parent=1 // pred_check
      %p90 = pneg %p89
    $region27: #{tpu_custom_call.1} parent=1 // pred_check_branch
      %92 = sbr.rel (%p90) target = $region29
    $region28: #{tpu_custom_call.1} parent=1 // pred_region
      %93 = vst [vmem:[#allocation8] sm:$0xff] %v88
    $region29: #{tpu_custom_call.1} parent=1 // pred_fallthru
      _
    %p94 = scmp.ne.s32.totalorder 0, 0
    // Predicated region
    $region30: #{tpu_custom_call.1} parent=1 // pred_check
      %p95 = pneg %p94
    $region31: #{tpu_custom_call.1} parent=1 // pred_check_branch
      %97 = sbr.rel (%p95) target = $region33
    $region32: #{tpu_custom_call.1} parent=1 // pred_region
      %v98 = vld [vmem:[#allocation8] sm:$0xff]
      %v99 = vadd.f32 %v98, %v88
      %100 = vst [vmem:[#allocation8] sm:$0xff] %v99
    $region33: #{tpu_custom_call.1} parent=1 // pred_fallthru
      _
    // Predicated region
    $region34: #{tpu_custom_call.1} parent=1 // pred_check
      _
    $region35: #{tpu_custom_call.1} parent=1 // pred_check_branch
      %102 = sbr.rel (0) target = $region37
    $region36: #{tpu_custom_call.1} parent=1 // pred_region
      %s104 = ssub.s32 128, 128
      %105 = vsyncadd [#allocation4], %s104
      %s107 = sshll.u32 [#allocation8], 4
      %s108 = int_to_ptr.vmem [resolvable:$true] %s107
      %110 = dma.vmem_to_hbm [thread:$0]  %s108, 128, %s3, [#allocation4]
    $region37: #{tpu_custom_call.1} parent=1 // pred_fallthru
      _
    // Predicated region
    $region38: #{tpu_custom_call.1} parent=1 // pred_check
      _
    $region39: #{tpu_custom_call.1} parent=1 // pred_check_branch
      %112 = sbr.rel (0) target = $region41
    $region40: #{tpu_custom_call.1} parent=1 // pred_region
      %113 = dma.done [#allocation4], 128
    $region41: #{tpu_custom_call.1} parent=1 // pred_fallthru
      _
    %114 = vsyncpa [#allocation3], 1
    %115 = vsyncpa [#allocation6], 1
    %116 = vsyncpa [#allocation4], 1

</llo_original>
